<compile_context>
chip_gen: v6e
topology: v6e:2x2x1
jax: 0.10.0
libtpu: 0.0.40
codegen_flags: <defaults>
</compile_context>

<pallas_src>
import numpy as np
import jax
import jax.numpy as jnp
from jax.experimental import pallas as pl
from jax.experimental.pallas import tpu as pltpu


# --------------------------------------------------------------------------
# Parameter construction (glue, plain numpy) -- mirrors HiPPO_LegS.__init__
# with measure='legs', discretization='bilinear'.
# --------------------------------------------------------------------------
def transition_legs(N):
    q = np.arange(N, dtype=np.float64)
    col, row = np.meshgrid(q, q)
    r = 2 * q + 1
    M = -(np.where(row >= col, r, 0) - np.diag(q))
    T = np.sqrt(np.diag(2 * q + 1))
    A = T @ M @ np.linalg.inv(T)
    B = np.diag(T)[:, None]
    return A, B


def build_stacked(N, max_length):
    """Returns (A_stacked, AT_stacked, B_stacked) as float32 numpy arrays.

    AT_stacked (= per-step A_t transposed) is precomputed ONCE here so the
    forward wrapper never has to materialize an (L, N, N) transpose per call.
    """
    A, B = transition_legs(N)
    B = B.squeeze(-1)
    I = np.eye(N)
    A_st = np.empty((max_length, N, N), dtype=np.float64)
    B_st = np.empty((max_length, N), dtype=np.float64)
    for t in range(1, max_length + 1):
        At = A / t
        Bt = B / t
        # bilinear discretization; (I - At/2) is lower-triangular & invertible,
        # np.linalg.solve matches solve_triangular here.
        M_l = I - At / 2
        A_st[t - 1] = np.linalg.solve(M_l, I + At / 2)
        B_st[t - 1] = np.linalg.solve(M_l, Bt)
    A_st32 = A_st.astype(np.float32)
    AT_st32 = np.ascontiguousarray(np.swapaxes(A_st32, -1, -2))
    return A_st32, AT_st32, B_st.astype(np.float32)


# --------------------------------------------------------------------------
# Pallas kernel: one grid step per chunk of T_CHUNK timesteps.
#   x_ref  : (1, batch, T_CHUNK)   -- inputs for this chunk (time on lanes)
#   b_ref  : (L_pad, N)            -- whole B, VMEM-resident
#   at_ref : (T_CHUNK, N, N)       -- A_t^T for this chunk
#   out_ref: (1, batch, T_CHUNK*N) -- lane-dense output tile for this chunk
#   c_ref  : (batch, N)            -- carried state (VMEM scratch)
# --------------------------------------------------------------------------
def hippo_chunk_kernel(x_ref, b_ref, at_ref, out_ref, c_ref):
    t_chunk = at_ref.shape[0]
    n = at_ref.shape[-1]
    t = pl.program_id(0)

    @pl.when(t == 0)
    def _():
        c_ref[...] = jnp.zeros_like(c_ref)

    # Slice this chunk's rows out of the resident B (sublane-aligned offset).
    t0 = pl.multiple_of(t * t_chunk, t_chunk)
    b_chunk = b_ref[pl.ds(t0, t_chunk), :]          # (T_CHUNK, N)
    x_blk = x_ref[0]                                # (batch, T_CHUNK)

    # Carry the state in registers across the statically-unrolled chunk loop.
    c = c_ref[...]                                  # (batch, N), f32
    for k in range(t_chunk):                        # static unroll (small T_CHUNK)
        u_k = x_blk[:, k:k + 1] * b_chunk[k:k + 1, :]            # (batch, N)
        c = jnp.dot(c, at_ref[k], preferred_element_type=jnp.float32) + u_k
        out_ref[0, :, k * n:(k + 1) * n] = c        # fill lane-dense output tile
    c_ref[...] = c                                  # write state once per chunk


def hippo_legs_forward(inputs, AT_stacked, B_stacked, *, t_chunk=8):
    """inputs: (L, batch) f32 -> output (L, batch, N) f32.

    AT_stacked: (max_length, N, N) pre-transposed A_t (A_t^T).
    B_stacked : (max_length, N).
    """
    L, batch = inputs.shape
    N = AT_stacked.shape[-1]
    num_chunks = int(pl.cdiv(L, t_chunk))
    L_pad = num_chunks * t_chunk
    pad = L_pad - L

    x = inputs.astype(jnp.float32)
    AT = AT_stacked[:L].astype(jnp.float32)
    Bm = B_stacked[:L].astype(jnp.float32)
    if pad:
        # Padded steps only affect outputs that are sliced away below.
        x = jnp.pad(x, ((0, pad), (0, 0)))
        AT = jnp.pad(AT, ((0, pad), (0, 0), (0, 0)))
        Bm = jnp.pad(Bm, ((0, pad), (0, 0)))

    # (L_pad, batch) -> (num_chunks, batch, t_chunk): time-within-chunk on lanes,
    # so the kernel indexes columns statically (no in-kernel transposes).
    x_blk = x.reshape(num_chunks, t_chunk, batch).transpose(0, 2, 1)

    out = pl.pallas_call(
        hippo_chunk_kernel,
        out_shape=jax.ShapeDtypeStruct((num_chunks, batch, t_chunk * N), jnp.float32),
        grid_spec=pltpu.PrefetchScalarGridSpec(
            num_scalar_prefetch=0,
            grid=(num_chunks,),
            in_specs=[
                pl.BlockSpec((1, batch, t_chunk), lambda t: (t, 0, 0)),   # x chunk
                pl.BlockSpec((L_pad, N), lambda t: (0, 0)),               # B resident
                pl.BlockSpec((t_chunk, N, N), lambda t: (t, 0, 0)),       # A^T chunk
            ],
            out_specs=pl.BlockSpec((1, batch, t_chunk * N), lambda t: (t, 0, 0)),
            scratch_shapes=[pltpu.VMEM((batch, N), jnp.float32)],
        ),
        compiler_params=pltpu.CompilerParams(
            dimension_semantics=("arbitrary",),   # carried state -> sequential grid
            vmem_limit_bytes=48 * 1024 * 1024,    # safe on v5e/v6e and v7x (64 MiB)
        ),
    )(x_blk, Bm, AT)

    # (num_chunks, batch, t_chunk*N) -> (L, batch, N)  (pure layout plumbing)
    out = out.reshape(num_chunks, batch, t_chunk, N).transpose(0, 2, 1, 3)
    out = out.reshape(L_pad, batch, N)[:L]
    return out


# --------------------------------------------------------------------------
# Pure-JAX reference (lax.scan) for correctness check.
# --------------------------------------------------------------------------
def ref_forward(inputs, A_stacked, B_stacked):
    L, batch = inputs.shape

    def step(c, args):
        A_t, B_t, x_t = args
        c = jnp.einsum("ij,bj->bi", A_t, c) + x_t[:, None] * B_t[None, :]
        return c, c

    N = A_stacked.shape[-1]
    c0 = jnp.zeros((batch, N), jnp.float32)
    _, ys = jax.lax.scan(step, c0, (A_stacked[:L], B_stacked[:L], inputs))
    return ys  # (L, batch, N)


if __name__ == "__main__":
    N = 32
    max_length = 64
    batch = 8
    T_CHUNK = 8

    A_np, AT_np, B_np = build_stacked(N, max_length)
    A_stacked = jnp.asarray(A_np)
    AT_stacked = jnp.asarray(AT_np)   # precomputed A^T (hoisted out of forward)
    B_stacked = jnp.asarray(B_np)

    key = jax.random.PRNGKey(0)

    # Test both an exact-multiple length and a ragged-tail length.
    for L in (24, 21):
        key, sub = jax.random.split(key)
        inputs = jax.random.normal(sub, (L, batch), dtype=jnp.float32)

        out = hippo_legs_forward(inputs, AT_stacked, B_stacked, t_chunk=T_CHUNK)
        out = jax.block_until_ready(out)

        ref = jax.block_until_ready(ref_forward(inputs, A_stacked, B_stacked))
        assert out.shape == (L, batch, N)
        np.testing.assert_allclose(np.asarray(out), np.asarray(ref),
                                   rtol=1e-4, atol=1e-4)

    print("KERNEL_OK")
</pallas_src>

<mosaic_0001>
module attributes {stable_mosaic.version = 11 : i64} {
  func.func @hippo_chunk_kernel(%arg0: i32, %arg1: memref<1x8x8xf32, #tpu.memory_space<vmem>>, %arg2: memref<24x32xf32, #tpu.memory_space<vmem>>, %arg3: memref<8x32x32xf32, #tpu.memory_space<vmem>>, %arg4: memref<1x8x256xf32, #tpu.memory_space<vmem>>, %arg5: memref<8x32xf32, #tpu.memory_space<vmem>>) attributes {dimension_semantics = [#tpu.dimension_semantics<arbitrary>], iteration_bounds = array<i64: 3>, scalar_prefetch = 0 : i64, scratch_operands = 1 : i64, tpu.core_type = #tpu.core_type<tc>, window_params = [{transform_indices = @transform_0, window_bounds = array<i64: 1, 8, 8>}, {pipeline_mode = #tpu.pipeline_mode<synchronous>, transform_indices = @transform_1, window_bounds = array<i64: 24, 32>}, {transform_indices = @transform_2, window_bounds = array<i64: 8, 32, 32>}, {transform_indices = @transform_3, window_bounds = array<i64: 1, 8, 256>}]} {
    %c0_i32 = arith.constant 0 : i32
    %0 = arith.cmpi eq, %arg0, %c0_i32 : i32
    %1 = arith.extui %0 : i1 to i32
    %c0_i32_0 = arith.constant 0 : i32
    %2 = arith.cmpi ne, %1, %c0_i32_0 : i32
    scf.if %2 {
      %cst_49 = arith.constant 0.000000e+00 : f32
      %107 = vector.broadcast %cst_49 : f32 to vector<8x32xf32>
      %c0_50 = arith.constant 0 : index
      %c0_51 = arith.constant 0 : index
      %108 = vector.load %arg5[%c0_50, %c0_51] : memref<8x32xf32, #tpu.memory_space<vmem>>, vector<8x32xf32>
      tpu.vector_store %arg5[%c0_50, %c0_51], %107 {strides = array<i32>} : memref<8x32xf32, #tpu.memory_space<vmem>>, vector<8x32xf32>,
    } else {
    }
    %c8_i32 = arith.constant 8 : i32
    %3 = arith.muli %arg0, %c8_i32 : i32
    %4 = tpu.assume_multiple %3, 8 : i32
    %5 = arith.index_cast %4 : i32 to index
    %c0 = arith.constant 0 : index
    %6 = vector.load %arg2[%5, %c0] : memref<24x32xf32, #tpu.memory_space<vmem>>, vector<8x32xf32>
    %c0_1 = arith.constant 0 : index
    %c0_2 = arith.constant 0 : index
    %c0_3 = arith.constant 0 : index
    %7 = vector.load %arg1[%c0_1, %c0_2, %c0_3] : memref<1x8x8xf32, #tpu.memory_space<vmem>>, vector<1x8x8xf32>
    %8 = vector.shape_cast %7 : vector<1x8x8xf32> to vector<8x8xf32>
    %c0_4 = arith.constant 0 : index
    %c0_5 = arith.constant 0 : index
    %9 = vector.load %arg5[%c0_4, %c0_5] : memref<8x32xf32, #tpu.memory_space<vmem>>, vector<8x32xf32>
    %10 = vector.extract_strided_slice %8 {offsets = [0, 0], sizes = [8, 1], strides = [1, 1]} : vector<8x8xf32> to vector<8x1xf32>
    %11 = vector.extract_strided_slice %6 {offsets = [0, 0], sizes = [1, 32], strides = [1, 1]} : vector<8x32xf32> to vector<1x32xf32>
    %12 = vector.broadcast %10 : vector<8x1xf32> to vector<8x32xf32>
    %13 = vector.broadcast %11 : vector<1x32xf32> to vector<8x32xf32>
    %14 = arith.mulf %12, %13 : vector<8x32xf32>
    %c0_6 = arith.constant 0 : index
    %c0_7 = arith.constant 0 : index
    %c0_8 = arith.constant 0 : index
    %15 = vector.load %arg3[%c0_6, %c0_7, %c0_8] : memref<8x32x32xf32, #tpu.memory_space<vmem>>, vector<1x32x32xf32>
    %16 = vector.shape_cast %15 : vector<1x32x32xf32> to vector<32x32xf32>
    %cst = arith.constant dense<0.000000e+00> : vector<8x32xf32>
    %17 = tpu.matmul %9, %16, %cst {dimension_numbers = #tpu.dot_dimension_numbers<[1], [0], [0], [1], [0, 0, 1, 1], [], []>} : vector<8x32xf32>, vector<32x32xf32>, vector<8x32xf32> -> vector<8x32xf32>
    %18 = arith.addf %17, %14 : vector<8x32xf32>
    %c0_9 = arith.constant 0 : index
    %c0_10 = arith.constant 0 : index
    %c0_11 = arith.constant 0 : index
    %19 = vector.load %arg4[%c0_9, %c0_10, %c0_11] : memref<1x8x256xf32, #tpu.memory_space<vmem>>, vector<1x8x32xf32>
    %20 = vector.shape_cast %19 : vector<1x8x32xf32> to vector<8x32xf32>
    %21 = vector.shape_cast %18 : vector<8x32xf32> to vector<1x8x32xf32>
    tpu.vector_store %arg4[%c0_9, %c0_10, %c0_11], %21 {strides = array<i32>} : memref<1x8x256xf32, #tpu.memory_space<vmem>>, vector<1x8x32xf32>,
    %22 = vector.extract_strided_slice %8 {offsets = [0, 1], sizes = [8, 1], strides = [1, 1]} : vector<8x8xf32> to vector<8x1xf32>
    %23 = vector.extract_strided_slice %6 {offsets = [1, 0], sizes = [1, 32], strides = [1, 1]} : vector<8x32xf32> to vector<1x32xf32>
    %24 = vector.broadcast %22 : vector<8x1xf32> to vector<8x32xf32>
    %25 = vector.broadcast %23 : vector<1x32xf32> to vector<8x32xf32>
    %26 = arith.mulf %24, %25 : vector<8x32xf32>
    %c1 = arith.constant 1 : index
    %c0_12 = arith.constant 0 : index
    %c0_13 = arith.constant 0 : index
    %27 = vector.load %arg3[%c1, %c0_12, %c0_13] : memref<8x32x32xf32, #tpu.memory_space<vmem>>, vector<1x32x32xf32>
    %28 = vector.shape_cast %27 : vector<1x32x32xf32> to vector<32x32xf32>
    %cst_14 = arith.constant dense<0.000000e+00> : vector<8x32xf32>
    %29 = tpu.matmul %18, %28, %cst_14 {dimension_numbers = #tpu.dot_dimension_numbers<[1], [0], [0], [1], [0, 0, 1, 1], [], []>} : vector<8x32xf32>, vector<32x32xf32>, vector<8x32xf32> -> vector<8x32xf32>
    %30 = arith.addf %29, %26 : vector<8x32xf32>
    %c0_15 = arith.constant 0 : index
    %c0_16 = arith.constant 0 : index
    %c32 = arith.constant 32 : index
    %31 = vector.load %arg4[%c0_15, %c0_16, %c32] : memref<1x8x256xf32, #tpu.memory_space<vmem>>, vector<1x8x32xf32>
    %32 = vector.shape_cast %31 : vector<1x8x32xf32> to vector<8x32xf32>
    %33 = vector.shape_cast %30 : vector<8x32xf32> to vector<1x8x32xf32>
    tpu.vector_store %arg4[%c0_15, %c0_16, %c32], %33 {strides = array<i32>} : memref<1x8x256xf32, #tpu.memory_space<vmem>>, vector<1x8x32xf32>,
    %34 = vector.extract_strided_slice %8 {offsets = [0, 2], sizes = [8, 1], strides = [1, 1]} : vector<8x8xf32> to vector<8x1xf32>
    %35 = vector.extract_strided_slice %6 {offsets = [2, 0], sizes = [1, 32], strides = [1, 1]} : vector<8x32xf32> to vector<1x32xf32>
    %36 = vector.broadcast %34 : vector<8x1xf32> to vector<8x32xf32>
    %37 = vector.broadcast %35 : vector<1x32xf32> to vector<8x32xf32>
    %38 = arith.mulf %36, %37 : vector<8x32xf32>
    %c2 = arith.constant 2 : index
    %c0_17 = arith.constant 0 : index
    %c0_18 = arith.constant 0 : index
    %39 = vector.load %arg3[%c2, %c0_17, %c0_18] : memref<8x32x32xf32, #tpu.memory_space<vmem>>, vector<1x32x32xf32>
    %40 = vector.shape_cast %39 : vector<1x32x32xf32> to vector<32x32xf32>
    %cst_19 = arith.constant dense<0.000000e+00> : vector<8x32xf32>
    %41 = tpu.matmul %30, %40, %cst_19 {dimension_numbers = #tpu.dot_dimension_numbers<[1], [0], [0], [1], [0, 0, 1, 1], [], []>} : vector<8x32xf32>, vector<32x32xf32>, vector<8x32xf32> -> vector<8x32xf32>
    %42 = arith.addf %41, %38 : vector<8x32xf32>
    %c0_20 = arith.constant 0 : index
    %c0_21 = arith.constant 0 : index
    %c64 = arith.constant 64 : index
    %43 = vector.load %arg4[%c0_20, %c0_21, %c64] : memref<1x8x256xf32, #tpu.memory_space<vmem>>, vector<1x8x32xf32>
    %44 = vector.shape_cast %43 : vector<1x8x32xf32> to vector<8x32xf32>
    %45 = vector.shape_cast %42 : vector<8x32xf32> to vector<1x8x32xf32>
    tpu.vector_store %arg4[%c0_20, %c0_21, %c64], %45 {strides = array<i32>} : memref<1x8x256xf32, #tpu.memory_space<vmem>>, vector<1x8x32xf32>,
    %46 = vector.extract_strided_slice %8 {offsets = [0, 3], sizes = [8, 1], strides = [1, 1]} : vector<8x8xf32> to vector<8x1xf32>
    %47 = vector.extract_strided_slice %6 {offsets = [3, 0], sizes = [1, 32], strides = [1, 1]} : vector<8x32xf32> to vector<1x32xf32>
    %48 = vector.broadcast %46 : vector<8x1xf32> to vector<8x32xf32>
    %49 = vector.broadcast %47 : vector<1x32xf32> to vector<8x32xf32>
    %50 = arith.mulf %48, %49 : vector<8x32xf32>
    %c3 = arith.constant 3 : index
    %c0_22 = arith.constant 0 : index
    %c0_23 = arith.constant 0 : index
    %51 = vector.load %arg3[%c3, %c0_22, %c0_23] : memref<8x32x32xf32, #tpu.memory_space<vmem>>, vector<1x32x32xf32>
    %52 = vector.shape_cast %51 : vector<1x32x32xf32> to vector<32x32xf32>
    %cst_24 = arith.constant dense<0.000000e+00> : vector<8x32xf32>
    %53 = tpu.matmul %42, %52, %cst_24 {dimension_numbers = #tpu.dot_dimension_numbers<[1], [0], [0], [1], [0, 0, 1, 1], [], []>} : vector<8x32xf32>, vector<32x32xf32>, vector<8x32xf32> -> vector<8x32xf32>
    %54 = arith.addf %53, %50 : vector<8x32xf32>
    %c0_25 = arith.constant 0 : index
    %c0_26 = arith.constant 0 : index
    %c96 = arith.constant 96 : index
    %55 = vector.load %arg4[%c0_25, %c0_26, %c96] : memref<1x8x256xf32, #tpu.memory_space<vmem>>, vector<1x8x32xf32>
    %56 = vector.shape_cast %55 : vector<1x8x32xf32> to vector<8x32xf32>
    %57 = vector.shape_cast %54 : vector<8x32xf32> to vector<1x8x32xf32>
    tpu.vector_store %arg4[%c0_25, %c0_26, %c96], %57 {strides = array<i32>} : memref<1x8x256xf32, #tpu.memory_space<vmem>>, vector<1x8x32xf32>,
    %58 = vector.extract_strided_slice %8 {offsets = [0, 4], sizes = [8, 1], strides = [1, 1]} : vector<8x8xf32> to vector<8x1xf32>
    %59 = vector.extract_strided_slice %6 {offsets = [4, 0], sizes = [1, 32], strides = [1, 1]} : vector<8x32xf32> to vector<1x32xf32>
    %60 = vector.broadcast %58 : vector<8x1xf32> to vector<8x32xf32>
    %61 = vector.broadcast %59 : vector<1x32xf32> to vector<8x32xf32>
    %62 = arith.mulf %60, %61 : vector<8x32xf32>
    %c4 = arith.constant 4 : index
    %c0_27 = arith.constant 0 : index
    %c0_28 = arith.constant 0 : index
    %63 = vector.load %arg3[%c4, %c0_27, %c0_28] : memref<8x32x32xf32, #tpu.memory_space<vmem>>, vector<1x32x32xf32>
    %64 = vector.shape_cast %63 : vector<1x32x32xf32> to vector<32x32xf32>
    %cst_29 = arith.constant dense<0.000000e+00> : vector<8x32xf32>
    %65 = tpu.matmul %54, %64, %cst_29 {dimension_numbers = #tpu.dot_dimension_numbers<[1], [0], [0], [1], [0, 0, 1, 1], [], []>} : vector<8x32xf32>, vector<32x32xf32>, vector<8x32xf32> -> vector<8x32xf32>
    %66 = arith.addf %65, %62 : vector<8x32xf32>
    %c0_30 = arith.constant 0 : index
    %c0_31 = arith.constant 0 : index
    %c128 = arith.constant 128 : index
    %67 = vector.load %arg4[%c0_30, %c0_31, %c128] : memref<1x8x256xf32, #tpu.memory_space<vmem>>, vector<1x8x32xf32>
    %68 = vector.shape_cast %67 : vector<1x8x32xf32> to vector<8x32xf32>
    %69 = vector.shape_cast %66 : vector<8x32xf32> to vector<1x8x32xf32>
    tpu.vector_store %arg4[%c0_30, %c0_31, %c128], %69 {strides = array<i32>} : memref<1x8x256xf32, #tpu.memory_space<vmem>>, vector<1x8x32xf32>,
    %70 = vector.extract_strided_slice %8 {offsets = [0, 5], sizes = [8, 1], strides = [1, 1]} : vector<8x8xf32> to vector<8x1xf32>
    %71 = vector.extract_strided_slice %6 {offsets = [5, 0], sizes = [1, 32], strides = [1, 1]} : vector<8x32xf32> to vector<1x32xf32>
    %72 = vector.broadcast %70 : vector<8x1xf32> to vector<8x32xf32>
    %73 = vector.broadcast %71 : vector<1x32xf32> to vector<8x32xf32>
    %74 = arith.mulf %72, %73 : vector<8x32xf32>
    %c5 = arith.constant 5 : index
    %c0_32 = arith.constant 0 : index
    %c0_33 = arith.constant 0 : index
    %75 = vector.load %arg3[%c5, %c0_32, %c0_33] : memref<8x32x32xf32, #tpu.memory_space<vmem>>, vector<1x32x32xf32>
    %76 = vector.shape_cast %75 : vector<1x32x32xf32> to vector<32x32xf32>
    %cst_34 = arith.constant dense<0.000000e+00> : vector<8x32xf32>
    %77 = tpu.matmul %66, %76, %cst_34 {dimension_numbers = #tpu.dot_dimension_numbers<[1], [0], [0], [1], [0, 0, 1, 1], [], []>} : vector<8x32xf32>, vector<32x32xf32>, vector<8x32xf32> -> vector<8x32xf32>
    %78 = arith.addf %77, %74 : vector<8x32xf32>
    %c0_35 = arith.constant 0 : index
    %c0_36 = arith.constant 0 : index
    %c160 = arith.constant 160 : index
    %79 = vector.load %arg4[%c0_35, %c0_36, %c160] : memref<1x8x256xf32, #tpu.memory_space<vmem>>, vector<1x8x32xf32>
    %80 = vector.shape_cast %79 : vector<1x8x32xf32> to vector<8x32xf32>
    %81 = vector.shape_cast %78 : vector<8x32xf32> to vector<1x8x32xf32>
    tpu.vector_store %arg4[%c0_35, %c0_36, %c160], %81 {strides = array<i32>} : memref<1x8x256xf32, #tpu.memory_space<vmem>>, vector<1x8x32xf32>,
    %82 = vector.extract_strided_slice %8 {offsets = [0, 6], sizes = [8, 1], strides = [1, 1]} : vector<8x8xf32> to vector<8x1xf32>
    %83 = vector.extract_strided_slice %6 {offsets = [6, 0], sizes = [1, 32], strides = [1, 1]} : vector<8x32xf32> to vector<1x32xf32>
    %84 = vector.broadcast %82 : vector<8x1xf32> to vector<8x32xf32>
    %85 = vector.broadcast %83 : vector<1x32xf32> to vector<8x32xf32>
    %86 = arith.mulf %84, %85 : vector<8x32xf32>
    %c6 = arith.constant 6 : index
    %c0_37 = arith.constant 0 : index
    %c0_38 = arith.constant 0 : index
    %87 = vector.load %arg3[%c6, %c0_37, %c0_38] : memref<8x32x32xf32, #tpu.memory_space<vmem>>, vector<1x32x32xf32>
    %88 = vector.shape_cast %87 : vector<1x32x32xf32> to vector<32x32xf32>
    %cst_39 = arith.constant dense<0.000000e+00> : vector<8x32xf32>
    %89 = tpu.matmul %78, %88, %cst_39 {dimension_numbers = #tpu.dot_dimension_numbers<[1], [0], [0], [1], [0, 0, 1, 1], [], []>} : vector<8x32xf32>, vector<32x32xf32>, vector<8x32xf32> -> vector<8x32xf32>
    %90 = arith.addf %89, %86 : vector<8x32xf32>
    %c0_40 = arith.constant 0 : index
    %c0_41 = arith.constant 0 : index
    %c192 = arith.constant 192 : index
    %91 = vector.load %arg4[%c0_40, %c0_41, %c192] : memref<1x8x256xf32, #tpu.memory_space<vmem>>, vector<1x8x32xf32>
    %92 = vector.shape_cast %91 : vector<1x8x32xf32> to vector<8x32xf32>
    %93 = vector.shape_cast %90 : vector<8x32xf32> to vector<1x8x32xf32>
    tpu.vector_store %arg4[%c0_40, %c0_41, %c192], %93 {strides = array<i32>} : memref<1x8x256xf32, #tpu.memory_space<vmem>>, vector<1x8x32xf32>,
    %94 = vector.extract_strided_slice %8 {offsets = [0, 7], sizes = [8, 1], strides = [1, 1]} : vector<8x8xf32> to vector<8x1xf32>
    %95 = vector.extract_strided_slice %6 {offsets = [7, 0], sizes = [1, 32], strides = [1, 1]} : vector<8x32xf32> to vector<1x32xf32>
    %96 = vector.broadcast %94 : vector<8x1xf32> to vector<8x32xf32>
    %97 = vector.broadcast %95 : vector<1x32xf32> to vector<8x32xf32>
    %98 = arith.mulf %96, %97 : vector<8x32xf32>
    %c7 = arith.constant 7 : index
    %c0_42 = arith.constant 0 : index
    %c0_43 = arith.constant 0 : index
    %99 = vector.load %arg3[%c7, %c0_42, %c0_43] : memref<8x32x32xf32, #tpu.memory_space<vmem>>, vector<1x32x32xf32>
    %100 = vector.shape_cast %99 : vector<1x32x32xf32> to vector<32x32xf32>
    %cst_44 = arith.constant dense<0.000000e+00> : vector<8x32xf32>
    %101 = tpu.matmul %90, %100, %cst_44 {dimension_numbers = #tpu.dot_dimension_numbers<[1], [0], [0], [1], [0, 0, 1, 1], [], []>} : vector<8x32xf32>, vector<32x32xf32>, vector<8x32xf32> -> vector<8x32xf32>
    %102 = arith.addf %101, %98 : vector<8x32xf32>
    %c0_45 = arith.constant 0 : index
    %c0_46 = arith.constant 0 : index
    %c224 = arith.constant 224 : index
    %103 = vector.load %arg4[%c0_45, %c0_46, %c224] : memref<1x8x256xf32, #tpu.memory_space<vmem>>, vector<1x8x32xf32>
    %104 = vector.shape_cast %103 : vector<1x8x32xf32> to vector<8x32xf32>
    %105 = vector.shape_cast %102 : vector<8x32xf32> to vector<1x8x32xf32>
    tpu.vector_store %arg4[%c0_45, %c0_46, %c224], %105 {strides = array<i32>} : memref<1x8x256xf32, #tpu.memory_space<vmem>>, vector<1x8x32xf32>,
    %c0_47 = arith.constant 0 : index
    %c0_48 = arith.constant 0 : index
    %106 = vector.load %arg5[%c0_47, %c0_48] : memref<8x32xf32, #tpu.memory_space<vmem>>, vector<8x32xf32>
    tpu.vector_store %arg5[%c0_47, %c0_48], %102 {strides = array<i32>} : memref<8x32xf32, #tpu.memory_space<vmem>>, vector<8x32xf32>,
    return
  }
  func.func @transform_0(%arg0: i32) -> (i32, i32, i32) {
    %c0_i32 = arith.constant 0 : i32
    %c0_i32_0 = arith.constant 0 : i32
    %c0_i32_1 = arith.constant 0 : i32
    return %arg0, %c0_i32, %c0_i32_0 : i32, i32, i32
  }
  func.func @transform_1(%arg0: i32) -> (i32, i32) {
    %c0_i32 = arith.constant 0 : i32
    %c0_i32_0 = arith.constant 0 : i32
    %c0_i32_1 = arith.constant 0 : i32
    return %c0_i32, %c0_i32_0 : i32, i32
  }
  func.func @transform_2(%arg0: i32) -> (i32, i32, i32) {
    %c0_i32 = arith.constant 0 : i32
    %c0_i32_0 = arith.constant 0 : i32
    %c0_i32_1 = arith.constant 0 : i32
    return %arg0, %c0_i32, %c0_i32_0 : i32, i32, i32
  }
  func.func @transform_3(%arg0: i32) -> (i32, i32, i32) {
    %c0_i32 = arith.constant 0 : i32
    %c0_i32_0 = arith.constant 0 : i32
    %c0_i32_1 = arith.constant 0 : i32
    return %arg0, %c0_i32, %c0_i32_0 : i32, i32, i32
  }
}

</mosaic_0001>

<llo_original>
// kernel: tpu_custom_call.1
$region0: #{tpu_custom_call.1}
  #allocation0 [shape = 'u32[]', space=smem, size = 0x4, offset = 0x4, fixed_abs, tag = 'smem constant byte address 0x4 - core index']
  #allocation1 [shape = 'u32[144,128]{1,0:T(1,128)}', space=vmem, size = 0x12000, scoped, tag = 'internal scratch']
  #allocation2 [shape = 'f32[8,32]{1,0:T(8,128)}', space=vmem, size = 0x1000, scoped, tag = 'scratch operand']
  %s0 = inlined_call_operand.hbm [shape: f32[3,8,8], index: 0, kind: input, shape index: {}]
  %s1 = inlined_call_operand.hbm [shape: f32[24,32], index: 1, kind: input, shape index: {}]
  %s2 = inlined_call_operand.hbm [shape: f32[24,32,32], index: 2, kind: input, shape index: {}]
  %s3 = inlined_call_operand.hbm [shape: f32[3,8,256], index: 3, kind: output, shape index: {}]
  %s4 = sld [smem:[#allocation0]]
  $region61: #{tpu_custom_call.1} parent=0
    _
  %s6 = ssub.s32 1, %s4
  %s7 = scalar_select 0, %s6, %s4
  $region1: #{tpu_custom_call.1} parent=0
    #allocation3 [shape = 'u8[8192]{0}', space=vmem, size = 0x2000, scoped, tag = 'input window, operand 0']
    #allocation4 [shape = 's32[2]{0}', space=sflag, size = 0x8, scoped, tag = 'scoped memory for tpu_custom_call.1']
    #allocation5 [shape = 's32[2]{0}', space=sflag, size = 0x8, scoped, tag = 'scoped memory for tpu_custom_call.1']
    #allocation6 [shape = 'u8[12288]{0}', space=vmem, size = 0x3000, scoped, tag = 'input window, operand 1, single buffered']
    #allocation7 [shape = 's32[1]{0}', space=sflag, size = 0x4, scoped, tag = 'scoped memory for tpu_custom_call.1']
    #allocation8 [shape = 'u8[262144]{0}', space=vmem, size = 0x40000, scoped, tag = 'input window, operand 2']
    #allocation9 [shape = 'u8[16384]{0}', space=vmem, size = 0x4000, scoped, tag = 'output window, operand 0']
    %8 = vsyncpa [#allocation4], 0
    %s9 = scalar_lea.sflag [#allocation4], 1
    %10 = vsyncpa %s9, 0
    %11 = vsyncpa [#allocation7], 0
    %12 = vsyncpa [#allocation5], 0
    %s13 = scalar_lea.sflag [#allocation5], 1
    %14 = vsyncpa %s13, 0
    loop: start=0, step=1, limit=5
    $region2: #{tpu_custom_call.1} parent=1 // loop_pre_header
      _
    $region3: #{tpu_custom_call.1} parent=1 // loop_header
      %s16 = sphi 0, %s20
      %p17 = scmp.ge.s32.totalorder %s16, 5
      %s26 = sphi 0, %s28
      %s29 = sphi 0, %s26
      %s30 = sphi 0, %s29
      %s46 = sphi 0, %s30
      %s50 = sphi 0, %s50
      %s52 = sphi 0, %s50
      %s53 = sphi 0, %s52
      %s67 = sphi 0, %s53
      %s73 = sphi 0, %s75
      %s76 = sphi 0, %s73
      %s77 = sphi 0, %s76
      %s93 = sphi 0, %s77
      %s99 = sphi 0, %s101
      %s102 = sphi 0, %s99
      %s103 = sphi 0, %s102
      %s119 = sphi 0, %s103
    $region4: #{tpu_custom_call.1} parent=1 // loop_header_branch
      %19 = sbr.rel (%p17) target = $region8
    $region5: #{tpu_custom_call.1} parent=1 // loop_body
      %s21 = ssub.s32 %s16, 1
      %s22 = ssub.s32 %s16, 2
      %s23 = sadd.s32 %s16, 1
      %s24 = ssub.s32 %s16, %s23
      %p25 = scmp.eq.s32.totalorder %s24, 0
      %s27 = sadd.s32 %s26, 1
      %s28 = scalar_select %p25, %s26, %s27
      %p31 = pneg %p25
      %p32 = scmp.eq.s32.totalorder %s16, 2
      %p33 = por %p31, %p32
      %p34 = scmp.ne.s32.totalorder %s26, %s29
      %p35 = scmp.eq.s32.totalorder %s16, 0
      %p36 = por %p34, %p35
      %p37 = scmp.ne.s32.totalorder %s26, %s29
      %p38 = scmp.eq.s32.totalorder %s21, 2
      %p39 = por %p37, %p38
      %p40 = scmp.ne.s32.totalorder %s29, %s30
      %p41 = scmp.eq.s32.totalorder %s21, 0
      %p42 = por %p40, %p41
      %p43 = scmp.ne.s32.totalorder %s29, %s30
      %p44 = scmp.eq.s32.totalorder %s22, 2
      %p45 = por %p43, %p44
      %p47 = scmp.ne.s32.totalorder %s30, %s46
      %p48 = scmp.eq.s32.totalorder %s22, 0
      %p49 = por %p47, %p48
      %s51 = sadd.s32 %s50, 1
      %p54 = scmp.eq.s32.totalorder %s16, 2
      %p55 = scmp.ne.s32.totalorder %s50, %s52
      %p56 = scmp.eq.s32.totalorder %s16, 0
      %p57 = por %p55, %p56
      %p58 = scmp.ne.s32.totalorder %s50, %s52
      %p59 = scmp.eq.s32.totalorder %s21, 2
      %p60 = por %p58, %p59
      %p61 = scmp.ne.s32.totalorder %s52, %s53
      %p62 = scmp.eq.s32.totalorder %s21, 0
      %p63 = por %p61, %p62
      %p64 = scmp.ne.s32.totalorder %s52, %s53
      %p65 = scmp.eq.s32.totalorder %s22, 2
      %p66 = por %p64, %p65
      %p68 = scmp.ne.s32.totalorder %s53, %s67
      %p69 = scmp.eq.s32.totalorder %s22, 0
      %p70 = por %p68, %p69
      %s71 = ssub.s32 %s16, %s23
      %p72 = scmp.eq.s32.totalorder %s71, 0
      %s74 = sadd.s32 %s73, 1
      %s75 = scalar_select %p72, %s73, %s74
      %p78 = pneg %p72
      %p79 = scmp.eq.s32.totalorder %s16, 2
      %p80 = por %p78, %p79
      %p81 = scmp.ne.s32.totalorder %s73, %s76
      %p82 = scmp.eq.s32.totalorder %s16, 0
      %p83 = por %p81, %p82
      %p84 = scmp.ne.s32.totalorder %s73, %s76
      %p85 = scmp.eq.s32.totalorder %s21, 2
      %p86 = por %p84, %p85
      %p87 = scmp.ne.s32.totalorder %s76, %s77
      %p88 = scmp.eq.s32.totalorder %s21, 0
      %p89 = por %p87, %p88
      %p90 = scmp.ne.s32.totalorder %s76, %s77
      %p91 = scmp.eq.s32.totalorder %s22, 2
      %p92 = por %p90, %p91
      %p94 = scmp.ne.s32.totalorder %s77, %s93
      %p95 = scmp.eq.s32.totalorder %s22, 0
      %p96 = por %p94, %p95
      %s97 = ssub.s32 %s16, %s23
      %p98 = scmp.eq.s32.totalorder %s97, 0
      %s100 = sadd.s32 %s99, 1
      %s101 = scalar_select %p98, %s99, %s100
      %p104 = pneg %p98
      %p105 = scmp.eq.s32.totalorder %s16, 2
      %p106 = por %p104, %p105
      %p107 = scmp.ne.s32.totalorder %s99, %s102
      %p108 = scmp.eq.s32.totalorder %s16, 0
      %p109 = por %p107, %p108
      %p110 = scmp.ne.s32.totalorder %s99, %s102
      %p111 = scmp.eq.s32.totalorder %s21, 2
      %p112 = por %p110, %p111
      %p113 = scmp.ne.s32.totalorder %s102, %s103
      %p114 = scmp.eq.s32.totalorder %s21, 0
      %p115 = por %p113, %p114
      %p116 = scmp.ne.s32.totalorder %s102, %s103
      %p117 = scmp.eq.s32.totalorder %s22, 2
      %p118 = por %p116, %p117
      %p120 = scmp.ne.s32.totalorder %s103, %s119
      %p121 = scmp.eq.s32.totalorder %s22, 0
      %p122 = por %p120, %p121
      %p123 = scmp.le.s32.totalorder 1, %s16
      %p124 = scmp.lt.s32.totalorder %s16, 4
      %p125 = pnand %p123, %p124
      %p126 = pneg %p125
      // Predicated region
      $region9: #{tpu_custom_call.1} parent=5 // pred_check
        _
      $region10: #{tpu_custom_call.1} parent=5 // pred_check_branch
        %128 = sbr.rel (%p125) target = $region12
      $region11: #{tpu_custom_call.1} parent=5 // pred_region
        %s129 = ssub.s32 %s16, 1
        // Predicated region
        $region13: #{tpu_custom_call.1} parent=11 // pred_check
          %p130 = pneg %p63
        $region14: #{tpu_custom_call.1} parent=11 // pred_check_branch
          %132 = sbr.rel (%p130) target = $region16
        $region15: #{tpu_custom_call.1} parent=11 // pred_region
          %s134 = ssub.s32 384, 384
          %135 = vsyncadd [#allocation7], %s134
          %s136 = sshll.u32 [#allocation6], 4
          %s137 = int_to_ptr.vmem [resolvable:$true] %s136
          %142 = dma.hbm_to_vmem [thread:$0]  %s1, 384, %s137, [#allocation7], 128, 128, 8
        $region16: #{tpu_custom_call.1} parent=11 // pred_fallthru
          _
      $region12: #{tpu_custom_call.1} parent=5 // pred_fallthru
        _
      %p143 = scmp.lt.s32.totalorder %s16, 3
      // Predicated region
      $region17: #{tpu_custom_call.1} parent=5 // pred_check
        %p144 = pneg %p143
      $region18: #{tpu_custom_call.1} parent=5 // pred_check_branch
        %146 = sbr.rel (%p144) target = $region20
      $region19: #{tpu_custom_call.1} parent=5 // pred_region
        // Predicated region
        $region21: #{tpu_custom_call.1} parent=19 // pred_check
          %p147 = pneg %p36
        $region22: #{tpu_custom_call.1} parent=19 // pred_check_branch
          %149 = sbr.rel (%p147) target = $region24
        $region23: #{tpu_custom_call.1} parent=19 // pred_region
          %s150 = sand.u32 %s16, 1
          %s151 = scalar_lea.sflag [#allocation4], %s150
          %s152 = sand.u32 %s26, 1
          %s153 = smul.addr %s152, 8
          %s154 = scalar_lea.vmem [#allocation3], %s153
          %s156 = ssub.s32 128, 128
          %157 = vsyncadd %s151, %s156
          %s158 = smul.addr %s16, 128
          %s159 = scalar_lea.hbm %s0, %s158
          %s161 = sshll.u32 %s154, 4
          %s162 = int_to_ptr.vmem [resolvable:$true] %s161
          %164 = dma.hbm_to_vmem [thread:$0]  %s159, 128, %s162, %s151
        $region24: #{tpu_custom_call.1} parent=19 // pred_fallthru
          _
        // Predicated region
        $region25: #{tpu_custom_call.1} parent=19 // pred_check
          %p165 = pneg %p83
        $region26: #{tpu_custom_call.1} parent=19 // pred_check_branch
          %167 = sbr.rel (%p165) target = $region28
        $region27: #{tpu_custom_call.1} parent=19 // pred_region
          %s168 = sand.u32 %s16, 1
          %s169 = scalar_lea.sflag [#allocation4], %s168
          %s170 = sand.u32 %s73, 1
          %s171 = smul.addr %s170, 256
          %s172 = scalar_lea.vmem [#allocation8], %s171
          %s173 = smul.u32 8, %s16
          %s175 = ssub.s32 4096, 4096
          %176 = vsyncadd %s169, %s175
          %s177 = smul.addr %s173, 4
          %s178 = smul.addr %s177, 128
          %s179 = scalar_lea.hbm %s2, %s178
          %s180 = sshll.u32 %s172, 4
          %s181 = int_to_ptr.vmem [resolvable:$true] %s180
          %186 = dma.hbm_to_vmem [thread:$0]  %s179, 4096, %s181, %s169, 128, 128, 8
        $region28: #{tpu_custom_call.1} parent=19 // pred_fallthru
          _
      $region20: #{tpu_custom_call.1} parent=5 // pred_fallthru
        _
      %p187 = scmp.le.s32.totalorder 1, %s16
      %p188 = scmp.lt.s32.totalorder %s16, 4
      %p189 = pnand %p187, %p188
      %p190 = pneg %p189
      // Predicated region
      $region29: #{tpu_custom_call.1} parent=5 // pred_check
        _
      $region30: #{tpu_custom_call.1} parent=5 // pred_check_branch
        %192 = sbr.rel (%p189) target = $region32
      $region31: #{tpu_custom_call.1} parent=5 // pred_region
        %s193 = ssub.s32 %s16, 1
        %s194 = sand.u32 %s21, 1
        %s195 = scalar_lea.sflag [#allocation4], %s194
        %s196 = sand.u32 %s29, 1
        %s197 = smul.addr %s196, 8
        %s198 = scalar_lea.vmem [#allocation3], %s197
        // Predicated region
        $region33: #{tpu_custom_call.1} parent=31 // pred_check
          %p199 = pneg %p42
        $region34: #{tpu_custom_call.1} parent=31 // pred_check_branch
          %201 = sbr.rel (%p199) target = $region36
        $region35: #{tpu_custom_call.1} parent=31 // pred_region
          %202 = dma.done %s195, 128
        $region36: #{tpu_custom_call.1} parent=31 // pred_fallthru
          _
        // Predicated region
        $region37: #{tpu_custom_call.1} parent=31 // pred_check
          %p203 = pneg %p63
        $region38: #{tpu_custom_call.1} parent=31 // pred_check_branch
          %205 = sbr.rel (%p203) target = $region40
        $region39: #{tpu_custom_call.1} parent=31 // pred_region
          %206 = dma.done [#allocation7], 384
        $region40: #{tpu_custom_call.1} parent=31 // pred_fallthru
          _
        %s207 = sand.u32 %s21, 1
        %s208 = scalar_lea.sflag [#allocation4], %s207
        %s209 = sand.u32 %s76, 1
        %s210 = smul.addr %s209, 256
        %s211 = scalar_lea.vmem [#allocation8], %s210
        // Predicated region
        $region41: #{tpu_custom_call.1} parent=31 // pred_check
          %p212 = pneg %p89
        $region42: #{tpu_custom_call.1} parent=31 // pred_check_branch
          %214 = sbr.rel (%p212) target = $region44
        $region43: #{tpu_custom_call.1} parent=31 // pred_region
          %215 = dma.done %s208, 4096
        $region44: #{tpu_custom_call.1} parent=31 // pred_fallthru
          _
        %s216 = sand.u32 %s21, 1
        %s217 = scalar_lea.sflag [#allocation4], %s216
        %s218 = sand.u32 %s29, 1
        %s219 = smul.addr %s218, 8
        %s220 = scalar_lea.vmem [#allocation3], %s219
        %p221 = pneg %p42
        %p222 = pneg %p39
        %p223 = pneg %p63
        %p224 = pneg %p60
        %s225 = sand.u32 %s21, 1
        %s226 = scalar_lea.sflag [#allocation4], %s225
        %s227 = sand.u32 %s76, 1
        %s228 = smul.addr %s227, 256
        %s229 = scalar_lea.vmem [#allocation8], %s228
        %p230 = pneg %p89
        %p231 = pneg %p86
        %p232 = pneg %p115
        %p233 = pneg %p112
        %s234 = sand.u32 %s102, 1
        %s235 = scalar_lea.sflag [#allocation5], %s234
        %s236 = sand.u32 %s102, 1
        %s237 = smul.addr %s236, 16
        %s238 = scalar_lea.vmem [#allocation9], %s237
        %s239 = smul.u32 8, %s21
        %p240 = scmp.eq.s32.totalorder %s21, 0
        // Predicated region
        $region45: #{tpu_custom_call.1} parent=31 // pred_check
          %p241 = pneg %p240
        $region46: #{tpu_custom_call.1} parent=31 // pred_check_branch
          %243 = sbr.rel (%p241) target = $region48
        $region47: #{tpu_custom_call.1} parent=31 // pred_region
          %vm244 = vcmask 261120
          %245 = vst.msk [vmem:[#allocation2] sm:$0xff] %vm244, 0.0
        $region48: #{tpu_custom_call.1} parent=31 // pred_fallthru
          _
        %s246 = smul.u32 %s21, 8
        %s247 = scalar_lea.vmem [#allocation6], %s246
        %v248 = vld [vmem:[%s247] sm:$0xff]
        %v249 = vld [vmem:[%s198] sm:$0xff]
        %v250 = vld [vmem:[#allocation2] sm:$0xff]
        %252 = vset.pattern.permute.xlu0 0
        %253 = vperm.xlu0 %252, %v249
        %v254 = vpop.permute.xlu0 %253
        %v256 = vlaneseq
        %v257 = vshrl.u32 %v256, 7
        %v258 = vsub.s32 0, %v257
        %v259 = vrot.slane %v248, %v258
        %v260 = vmul.f32 %v254, %v259
        %v261 = vld [vmem:[%s211] sm:$0xff]
        %v262 = vld [vmem:[%s211 + $0x8] sm:$0xff]
        %v263 = vld [vmem:[%s211 + $0x10] sm:$0xff]
        %v264 = vld [vmem:[%s211 + $0x18] sm:$0xff]
        %vm265 = vcmask 261120
        %v267 = vsel %vm265, %v250, 0
        %269 = vmatprep.subr.mxu0 0.0
        %270 = vmatpush1.msra.mxu0 0.0
        %271 = vmatprep.subr.mxu0 0.0
        %272 = vmatpush1.msra.mxu0 0.0
        %273 = vmatprep.subr.mxu0 0.0
        %274 = vmatpush1.msra.mxu0 0.0
        %275 = vmatprep.subr.mxu0 0.0
        %276 = vmatpush1.msra.mxu0 0.0
        %277 = vmatprep.subr.mxu0 0.0
        %278 = vmatpush1.msra.mxu0 0.0
        %279 = vmatprep.subr.mxu0 0.0
        %280 = vmatpush1.msra.mxu0 0.0
        %281 = vmatprep.subr.mxu0 0.0
        %282 = vmatpush1.msra.mxu0 0.0
        %283 = vmatprep.subr.mxu0 0.0
        %284 = vmatpush1.msra.mxu0 0.0
        %285 = vmatprep.subr.mxu0 0.0
        %286 = vmatpush1.msra.mxu0 0.0
        %287 = vmatprep.subr.mxu0 0.0
        %288 = vmatpush1.msra.mxu0 0.0
        %289 = vmatprep.subr.mxu0 0.0
        %290 = vmatpush1.msra.mxu0 0.0
        %291 = vmatprep.subr.mxu0 0.0
        %292 = vmatpush1.msra.mxu0 0.0
        %293 = vmatprep.subr.mxu0 0.0
        %294 = vmatpush1.msra.mxu0 %v264
        %295 = vmatprep.subr.mxu0 0.0
        %296 = vmatpush1.msra.mxu0 %v263
        %297 = vmatprep.subr.mxu0 0.0
        %298 = vmatpush1.msra.mxu0 %v262
        %299 = vmatprep.subr.mxu0 0.0
        %300 = vmatpush1.msra.mxu0 %v261
        %301 = vmatprep.subr.mxu0 0.0
        %302 = vmatpush2.msra.mxu0 0.0
        %303 = vmatprep.subr.mxu0 0.0
        %304 = vmatpush2.msra.mxu0 0.0
        %305 = vmatprep.subr.mxu0 0.0
        %306 = vmatpush2.msra.mxu0 0.0
        %307 = vmatprep.subr.mxu0 0.0
        %308 = vmatpush2.msra.mxu0 0.0
        %309 = vmatprep.subr.mxu0 0.0
        %310 = vmatpush2.msra.mxu0 0.0
        %311 = vmatprep.subr.mxu0 0.0
        %312 = vmatpush2.msra.mxu0 0.0
        %313 = vmatprep.subr.mxu0 0.0
        %314 = vmatpush2.msra.mxu0 0.0
        %315 = vmatprep.subr.mxu0 0.0
        %316 = vmatpush2.msra.mxu0 0.0
        %317 = vmatprep.subr.mxu0 0.0
        %318 = vmatpush2.msra.mxu0 0.0
        %319 = vmatprep.subr.mxu0 0.0
        %320 = vmatpush2.msra.mxu0 0.0
        %321 = vmatprep.subr.mxu0 0.0
        %322 = vmatpush2.msra.mxu0 0.0
        %323 = vmatprep.subr.mxu0 0.0
        %324 = vmatpush2.msra.mxu0 0.0
        %325 = vmatprep.subr.mxu0 0.0
        %326 = vmatpush2.msra.mxu0 0.0
        %327 = vmatprep.subr.mxu0 0.0
        %328 = vmatpush2.msra.mxu0 0.0
        %329 = vmatprep.subr.mxu0 0.0
        %330 = vmatpush2.msra.mxu0 0.0
        %331 = vmatprep.subr.mxu0 0.0
        %332 = vmatpush2.msra.mxu0 0.0
        %333 = vmatprep.mubr.f32.mxu0 0.0
        %334 = vmatmul.mubr.f32.gmra.mxu0 %v267
        %v335 = vpop.f32.mrf.mxu0
        %v336 = vadd.f32 %v260, %v335
        %v337 = vpop.f32.mrf.mxu0
        %338 = vdwg.mxu0
        %339 = vst.msk [vmem:[%s238] sm:$0xff] %vm265, %v336
        %340 = vset.pattern.permute.xlu0 1
        %341 = vperm.xlu0 %340, %v249
        %v342 = vpop.permute.xlu0 %341
        %v344 = vlaneseq
        %v345 = vshrl.u32 %v344, 7
        %v346 = vsub.s32 1, %v345
        %v347 = vrot.slane %v248, %v346
        %v348 = vmul.f32 %v342, %v347
        %s349 = scalar_lea.vmem %s211, 32 [#allocation8]
        %v350 = vld [vmem:[%s349] sm:$0xff]
        %v351 = vld [vmem:[%s349 + $0x8] sm:$0xff]
        %v352 = vld [vmem:[%s349 + $0x10] sm:$0xff]
        %v353 = vld [vmem:[%s349 + $0x18] sm:$0xff]
        %v355 = vsel %vm265, %v336, 0
        %357 = vmatprep.subr.mxu0 0.0
        %358 = vmatpush1.msra.mxu0 0.0
        %359 = vmatprep.subr.mxu0 0.0
        %360 = vmatpush1.msra.mxu0 0.0
        %361 = vmatprep.subr.mxu0 0.0
        %362 = vmatpush1.msra.mxu0 0.0
        %363 = vmatprep.subr.mxu0 0.0
        %364 = vmatpush1.msra.mxu0 0.0
        %365 = vmatprep.subr.mxu0 0.0
        %366 = vmatpush1.msra.mxu0 0.0
        %367 = vmatprep.subr.mxu0 0.0
        %368 = vmatpush1.msra.mxu0 0.0
        %369 = vmatprep.subr.mxu0 0.0
        %370 = vmatpush1.msra.mxu0 0.0
        %371 = vmatprep.subr.mxu0 0.0
        %372 = vmatpush1.msra.mxu0 0.0
        %373 = vmatprep.subr.mxu0 0.0
        %374 = vmatpush1.msra.mxu0 0.0
        %375 = vmatprep.subr.mxu0 0.0
        %376 = vmatpush1.msra.mxu0 0.0
        %377 = vmatprep.subr.mxu0 0.0
        %378 = vmatpush1.msra.mxu0 0.0
        %379 = vmatprep.subr.mxu0 0.0
        %380 = vmatpush1.msra.mxu0 0.0
        %381 = vmatprep.subr.mxu0 0.0
        %382 = vmatpush1.msra.mxu0 %v353
        %383 = vmatprep.subr.mxu0 0.0
        %384 = vmatpush1.msra.mxu0 %v352
        %385 = vmatprep.subr.mxu0 0.0
        %386 = vmatpush1.msra.mxu0 %v351
        %387 = vmatprep.subr.mxu0 0.0
        %388 = vmatpush1.msra.mxu0 %v350
        %389 = vmatprep.subr.mxu0 0.0
        %390 = vmatpush2.msra.mxu0 0.0
        %391 = vmatprep.subr.mxu0 0.0
        %392 = vmatpush2.msra.mxu0 0.0
        %393 = vmatprep.subr.mxu0 0.0
        %394 = vmatpush2.msra.mxu0 0.0
        %395 = vmatprep.subr.mxu0 0.0
        %396 = vmatpush2.msra.mxu0 0.0
        %397 = vmatprep.subr.mxu0 0.0
        %398 = vmatpush2.msra.mxu0 0.0
        %399 = vmatprep.subr.mxu0 0.0
        %400 = vmatpush2.msra.mxu0 0.0
        %401 = vmatprep.subr.mxu0 0.0
        %402 = vmatpush2.msra.mxu0 0.0
        %403 = vmatprep.subr.mxu0 0.0
        %404 = vmatpush2.msra.mxu0 0.0
        %405 = vmatprep.subr.mxu0 0.0
        %406 = vmatpush2.msra.mxu0 0.0
        %407 = vmatprep.subr.mxu0 0.0
        %408 = vmatpush2.msra.mxu0 0.0
        %409 = vmatprep.subr.mxu0 0.0
        %410 = vmatpush2.msra.mxu0 0.0
        %411 = vmatprep.subr.mxu0 0.0
        %412 = vmatpush2.msra.mxu0 0.0
        %413 = vmatprep.subr.mxu0 0.0
        %414 = vmatpush2.msra.mxu0 0.0
        %415 = vmatprep.subr.mxu0 0.0
        %416 = vmatpush2.msra.mxu0 0.0
        %417 = vmatprep.subr.mxu0 0.0
        %418 = vmatpush2.msra.mxu0 0.0
        %419 = vmatprep.subr.mxu0 0.0
        %420 = vmatpush2.msra.mxu0 0.0
        %421 = vmatprep.mubr.f32.mxu0 0.0
        %422 = vmatmul.mubr.f32.gmra.mxu0 %v355
        %v423 = vpop.f32.mrf.mxu0
        %v424 = vadd.f32 %v348, %v423
        %v425 = vpop.f32.mrf.mxu0
        %426 = vdwg.mxu0
        %428 = vrot.lane.b32.xlu0 %v424, 32
        %v429 = vpop.permute.xlu0 %428
        %vm431 = vcmask 523520
        %432 = vst.msk [vmem:[%s238] sm:$0xff] %vm431, %v429
        %433 = vset.pattern.permute.xlu0 2
        %434 = vperm.xlu0 %433, %v249
        %v435 = vpop.permute.xlu0 %434
        %v437 = vlaneseq
        %v438 = vshrl.u32 %v437, 7
        %v439 = vsub.s32 2, %v438
        %v440 = vrot.slane %v248, %v439
        %v441 = vmul.f32 %v435, %v440
        %s442 = scalar_lea.vmem %s211, 64 [#allocation8]
        %v443 = vld [vmem:[%s442] sm:$0xff]
        %v444 = vld [vmem:[%s442 + $0x8] sm:$0xff]
        %v445 = vld [vmem:[%s442 + $0x10] sm:$0xff]
        %v446 = vld [vmem:[%s442 + $0x18] sm:$0xff]
        %v447 = vsel %vm265, %v424, 0
        %449 = vmatprep.subr.mxu0 0.0
        %450 = vmatpush1.msra.mxu0 0.0
        %451 = vmatprep.subr.mxu0 0.0
        %452 = vmatpush1.msra.mxu0 0.0
        %453 = vmatprep.subr.mxu0 0.0
        %454 = vmatpush1.msra.mxu0 0.0
        %455 = vmatprep.subr.mxu0 0.0
        %456 = vmatpush1.msra.mxu0 0.0
        %457 = vmatprep.subr.mxu0 0.0
        %458 = vmatpush1.msra.mxu0 0.0
        %459 = vmatprep.subr.mxu0 0.0
        %460 = vmatpush1.msra.mxu0 0.0
        %461 = vmatprep.subr.mxu0 0.0
        %462 = vmatpush1.msra.mxu0 0.0
        %463 = vmatprep.subr.mxu0 0.0
        %464 = vmatpush1.msra.mxu0 0.0
        %465 = vmatprep.subr.mxu0 0.0
        %466 = vmatpush1.msra.mxu0 0.0
        %467 = vmatprep.subr.mxu0 0.0
        %468 = vmatpush1.msra.mxu0 0.0
        %469 = vmatprep.subr.mxu0 0.0
        %470 = vmatpush1.msra.mxu0 0.0
        %471 = vmatprep.subr.mxu0 0.0
        %472 = vmatpush1.msra.mxu0 0.0
        %473 = vmatprep.subr.mxu0 0.0
        %474 = vmatpush1.msra.mxu0 %v446
        %475 = vmatprep.subr.mxu0 0.0
        %476 = vmatpush1.msra.mxu0 %v445
        %477 = vmatprep.subr.mxu0 0.0
        %478 = vmatpush1.msra.mxu0 %v444
        %479 = vmatprep.subr.mxu0 0.0
        %480 = vmatpush1.msra.mxu0 %v443
        %481 = vmatprep.subr.mxu0 0.0
        %482 = vmatpush2.msra.mxu0 0.0
        %483 = vmatprep.subr.mxu0 0.0
        %484 = vmatpush2.msra.mxu0 0.0
        %485 = vmatprep.subr.mxu0 0.0
        %486 = vmatpush2.msra.mxu0 0.0
        %487 = vmatprep.subr.mxu0 0.0
        %488 = vmatpush2.msra.mxu0 0.0
        %489 = vmatprep.subr.mxu0 0.0
        %490 = vmatpush2.msra.mxu0 0.0
        %491 = vmatprep.subr.mxu0 0.0
        %492 = vmatpush2.msra.mxu0 0.0
        %493 = vmatprep.subr.mxu0 0.0
        %494 = vmatpush2.msra.mxu0 0.0
        %495 = vmatprep.subr.mxu0 0.0
        %496 = vmatpush2.msra.mxu0 0.0
        %497 = vmatprep.subr.mxu0 0.0
        %498 = vmatpush2.msra.mxu0 0.0
        %499 = vmatprep.subr.mxu0 0.0
        %500 = vmatpush2.msra.mxu0 0.0
        %501 = vmatprep.subr.mxu0 0.0
        %502 = vmatpush2.msra.mxu0 0.0
        %503 = vmatprep.subr.mxu0 0.0
        %504 = vmatpush2.msra.mxu0 0.0
        %505 = vmatprep.subr.mxu0 0.0
        %506 = vmatpush2.msra.mxu0 0.0
        %507 = vmatprep.subr.mxu0 0.0
        %508 = vmatpush2.msra.mxu0 0.0
        %509 = vmatprep.subr.mxu0 0.0
        %510 = vmatpush2.msra.mxu0 0.0
        %511 = vmatprep.subr.mxu0 0.0
        %512 = vmatpush2.msra.mxu0 0.0
        %513 = vmatprep.mubr.f32.mxu0 0.0
        %514 = vmatmul.mubr.f32.gmra.mxu0 %v447
        %v515 = vpop.f32.mrf.mxu0
        %v516 = vadd.f32 %v441, %v515
        %v517 = vpop.f32.mrf.mxu0
        %518 = vdwg.mxu0
        %520 = vrot.lane.b32.xlu0 %v516, 64
        %v521 = vpop.permute.xlu0 %520
        %vm523 = vcmask 785920
        %524 = vst.msk [vmem:[%s238] sm:$0xff] %vm523, %v521
        %525 = vset.pattern.permute.xlu0 3
        %526 = vperm.xlu0 %525, %v249
        %v527 = vpop.permute.xlu0 %526
        %v529 = vlaneseq
        %v530 = vshrl.u32 %v529, 7
        %v531 = vsub.s32 3, %v530
        %v532 = vrot.slane %v248, %v531
        %v533 = vmul.f32 %v527, %v532
        %s534 = scalar_lea.vmem %s211, 96 [#allocation8]
        %v535 = vld [vmem:[%s534] sm:$0xff]
        %v536 = vld [vmem:[%s534 + $0x8] sm:$0xff]
        %v537 = vld [vmem:[%s534 + $0x10] sm:$0xff]
        %v538 = vld [vmem:[%s534 + $0x18] sm:$0xff]
        %v539 = vsel %vm265, %v516, 0
        %541 = vmatprep.subr.mxu0 0.0
        %542 = vmatpush1.msra.mxu0 0.0
        %543 = vmatprep.subr.mxu0 0.0
        %544 = vmatpush1.msra.mxu0 0.0
        %545 = vmatprep.subr.mxu0 0.0
        %546 = vmatpush1.msra.mxu0 0.0
        %547 = vmatprep.subr.mxu0 0.0
        %548 = vmatpush1.msra.mxu0 0.0
        %549 = vmatprep.subr.mxu0 0.0
        %550 = vmatpush1.msra.mxu0 0.0
        %551 = vmatprep.subr.mxu0 0.0
        %552 = vmatpush1.msra.mxu0 0.0
        %553 = vmatprep.subr.mxu0 0.0
        %554 = vmatpush1.msra.mxu0 0.0
        %555 = vmatprep.subr.mxu0 0.0
        %556 = vmatpush1.msra.mxu0 0.0
        %557 = vmatprep.subr.mxu0 0.0
        %558 = vmatpush1.msra.mxu0 0.0
        %559 = vmatprep.subr.mxu0 0.0
        %560 = vmatpush1.msra.mxu0 0.0
        %561 = vmatprep.subr.mxu0 0.0
        %562 = vmatpush1.msra.mxu0 0.0
        %563 = vmatprep.subr.mxu0 0.0
        %564 = vmatpush1.msra.mxu0 0.0
        %565 = vmatprep.subr.mxu0 0.0
        %566 = vmatpush1.msra.mxu0 %v538
        %567 = vmatprep.subr.mxu0 0.0
        %568 = vmatpush1.msra.mxu0 %v537
        %569 = vmatprep.subr.mxu0 0.0
        %570 = vmatpush1.msra.mxu0 %v536
        %571 = vmatprep.subr.mxu0 0.0
        %572 = vmatpush1.msra.mxu0 %v535
        %573 = vmatprep.subr.mxu0 0.0
        %574 = vmatpush2.msra.mxu0 0.0
        %575 = vmatprep.subr.mxu0 0.0
        %576 = vmatpush2.msra.mxu0 0.0
        %577 = vmatprep.subr.mxu0 0.0
        %578 = vmatpush2.msra.mxu0 0.0
        %579 = vmatprep.subr.mxu0 0.0
        %580 = vmatpush2.msra.mxu0 0.0
        %581 = vmatprep.subr.mxu0 0.0
        %582 = vmatpush2.msra.mxu0 0.0
        %583 = vmatprep.subr.mxu0 0.0
        %584 = vmatpush2.msra.mxu0 0.0
        %585 = vmatprep.subr.mxu0 0.0
        %586 = vmatpush2.msra.mxu0 0.0
        %587 = vmatprep.subr.mxu0 0.0
        %588 = vmatpush2.msra.mxu0 0.0
        %589 = vmatprep.subr.mxu0 0.0
        %590 = vmatpush2.msra.mxu0 0.0
        %591 = vmatprep.subr.mxu0 0.0
        %592 = vmatpush2.msra.mxu0 0.0
        %593 = vmatprep.subr.mxu0 0.0
        %594 = vmatpush2.msra.mxu0 0.0
        %595 = vmatprep.subr.mxu0 0.0
        %596 = vmatpush2.msra.mxu0 0.0
        %597 = vmatprep.subr.mxu0 0.0
        %598 = vmatpush2.msra.mxu0 0.0
        %599 = vmatprep.subr.mxu0 0.0
        %600 = vmatpush2.msra.mxu0 0.0
        %601 = vmatprep.subr.mxu0 0.0
        %602 = vmatpush2.msra.mxu0 0.0
        %603 = vmatprep.subr.mxu0 0.0
        %604 = vmatpush2.msra.mxu0 0.0
        %605 = vmatprep.mubr.f32.mxu0 0.0
        %606 = vmatmul.mubr.f32.gmra.mxu0 %v539
        %v607 = vpop.f32.mrf.mxu0
        %v608 = vadd.f32 %v533, %v607
        %v609 = vpop.f32.mrf.mxu0
        %610 = vdwg.mxu0
        %612 = vrot.lane.b32.xlu0 %v608, 96
        %v613 = vpop.permute.xlu0 %612
        %vm615 = vcmask 1048320
        %616 = vst.msk [vmem:[%s238] sm:$0xff] %vm615, %v613
        %617 = vset.pattern.permute.xlu0 4
        %618 = vperm.xlu0 %617, %v249
        %v619 = vpop.permute.xlu0 %618
        %v621 = vlaneseq
        %v622 = vshrl.u32 %v621, 7
        %v623 = vsub.s32 4, %v622
        %v624 = vrot.slane %v248, %v623
        %v625 = vmul.f32 %v619, %v624
        %s626 = scalar_lea.vmem %s211, 128 [#allocation8]
        %v627 = vld [vmem:[%s626] sm:$0xff]
        %v628 = vld [vmem:[%s626 + $0x8] sm:$0xff]
        %v629 = vld [vmem:[%s626 + $0x10] sm:$0xff]
        %v630 = vld [vmem:[%s626 + $0x18] sm:$0xff]
        %v631 = vsel %vm265, %v608, 0
        %633 = vmatprep.subr.mxu0 0.0
        %634 = vmatpush1.msra.mxu0 0.0
        %635 = vmatprep.subr.mxu0 0.0
        %636 = vmatpush1.msra.mxu0 0.0
        %637 = vmatprep.subr.mxu0 0.0
        %638 = vmatpush1.msra.mxu0 0.0
        %639 = vmatprep.subr.mxu0 0.0
        %640 = vmatpush1.msra.mxu0 0.0
        %641 = vmatprep.subr.mxu0 0.0
        %642 = vmatpush1.msra.mxu0 0.0
        %643 = vmatprep.subr.mxu0 0.0
        %644 = vmatpush1.msra.mxu0 0.0
        %645 = vmatprep.subr.mxu0 0.0
        %646 = vmatpush1.msra.mxu0 0.0
        %647 = vmatprep.subr.mxu0 0.0
        %648 = vmatpush1.msra.mxu0 0.0
        %649 = vmatprep.subr.mxu0 0.0
        %650 = vmatpush1.msra.mxu0 0.0
        %651 = vmatprep.subr.mxu0 0.0
        %652 = vmatpush1.msra.mxu0 0.0
        %653 = vmatprep.subr.mxu0 0.0
        %654 = vmatpush1.msra.mxu0 0.0
        %655 = vmatprep.subr.mxu0 0.0
        %656 = vmatpush1.msra.mxu0 0.0
        %657 = vmatprep.subr.mxu0 0.0
        %658 = vmatpush1.msra.mxu0 %v630
        %659 = vmatprep.subr.mxu0 0.0
        %660 = vmatpush1.msra.mxu0 %v629
        %661 = vmatprep.subr.mxu0 0.0
        %662 = vmatpush1.msra.mxu0 %v628
        %663 = vmatprep.subr.mxu0 0.0
        %664 = vmatpush1.msra.mxu0 %v627
        %665 = vmatprep.subr.mxu0 0.0
        %666 = vmatpush2.msra.mxu0 0.0
        %667 = vmatprep.subr.mxu0 0.0
        %668 = vmatpush2.msra.mxu0 0.0
        %669 = vmatprep.subr.mxu0 0.0
        %670 = vmatpush2.msra.mxu0 0.0
        %671 = vmatprep.subr.mxu0 0.0
        %672 = vmatpush2.msra.mxu0 0.0
        %673 = vmatprep.subr.mxu0 0.0
        %674 = vmatpush2.msra.mxu0 0.0
        %675 = vmatprep.subr.mxu0 0.0
        %676 = vmatpush2.msra.mxu0 0.0
        %677 = vmatprep.subr.mxu0 0.0
        %678 = vmatpush2.msra.mxu0 0.0
        %679 = vmatprep.subr.mxu0 0.0
        %680 = vmatpush2.msra.mxu0 0.0
        %681 = vmatprep.subr.mxu0 0.0
        %682 = vmatpush2.msra.mxu0 0.0
        %683 = vmatprep.subr.mxu0 0.0
        %684 = vmatpush2.msra.mxu0 0.0
        %685 = vmatprep.subr.mxu0 0.0
        %686 = vmatpush2.msra.mxu0 0.0
        %687 = vmatprep.subr.mxu0 0.0
        %688 = vmatpush2.msra.mxu0 0.0
        %689 = vmatprep.subr.mxu0 0.0
        %690 = vmatpush2.msra.mxu0 0.0
        %691 = vmatprep.subr.mxu0 0.0
        %692 = vmatpush2.msra.mxu0 0.0
        %693 = vmatprep.subr.mxu0 0.0
        %694 = vmatpush2.msra.mxu0 0.0
        %695 = vmatprep.subr.mxu0 0.0
        %696 = vmatpush2.msra.mxu0 0.0
        %697 = vmatprep.mubr.f32.mxu0 0.0
        %698 = vmatmul.mubr.f32.gmra.mxu0 %v631
        %v699 = vpop.f32.mrf.mxu0
        %v700 = vadd.f32 %v625, %v699
        %v701 = vpop.f32.mrf.mxu0
        %702 = vdwg.mxu0
        %703 = vst.msk [vmem:[%s238 + $0x8] sm:$0xff] %vm265, %v700
        %704 = vset.pattern.permute.xlu0 5
        %705 = vperm.xlu0 %704, %v249
        %v706 = vpop.permute.xlu0 %705
        %v708 = vlaneseq
        %v709 = vshrl.u32 %v708, 7
        %v710 = vsub.s32 5, %v709
        %v711 = vrot.slane %v248, %v710
        %v712 = vmul.f32 %v706, %v711
        %s713 = scalar_lea.vmem %s211, 160 [#allocation8]
        %v714 = vld [vmem:[%s713] sm:$0xff]
        %v715 = vld [vmem:[%s713 + $0x8] sm:$0xff]
        %v716 = vld [vmem:[%s713 + $0x10] sm:$0xff]
        %v717 = vld [vmem:[%s713 + $0x18] sm:$0xff]
        %v719 = vsel %vm265, %v700, 0
        %721 = vmatprep.subr.mxu0 0.0
        %722 = vmatpush1.msra.mxu0 0.0
        %723 = vmatprep.subr.mxu0 0.0
        %724 = vmatpush1.msra.mxu0 0.0
        %725 = vmatprep.subr.mxu0 0.0
        %726 = vmatpush1.msra.mxu0 0.0
        %727 = vmatprep.subr.mxu0 0.0
        %728 = vmatpush1.msra.mxu0 0.0
        %729 = vmatprep.subr.mxu0 0.0
        %730 = vmatpush1.msra.mxu0 0.0
        %731 = vmatprep.subr.mxu0 0.0
        %732 = vmatpush1.msra.mxu0 0.0
        %733 = vmatprep.subr.mxu0 0.0
        %734 = vmatpush1.msra.mxu0 0.0
        %735 = vmatprep.subr.mxu0 0.0
        %736 = vmatpush1.msra.mxu0 0.0
        %737 = vmatprep.subr.mxu0 0.0
        %738 = vmatpush1.msra.mxu0 0.0
        %739 = vmatprep.subr.mxu0 0.0
        %740 = vmatpush1.msra.mxu0 0.0
        %741 = vmatprep.subr.mxu0 0.0
        %742 = vmatpush1.msra.mxu0 0.0
        %743 = vmatprep.subr.mxu0 0.0
        %744 = vmatpush1.msra.mxu0 0.0
        %745 = vmatprep.subr.mxu0 0.0
        %746 = vmatpush1.msra.mxu0 %v717
        %747 = vmatprep.subr.mxu0 0.0
        %748 = vmatpush1.msra.mxu0 %v716
        %749 = vmatprep.subr.mxu0 0.0
        %750 = vmatpush1.msra.mxu0 %v715
        %751 = vmatprep.subr.mxu0 0.0
        %752 = vmatpush1.msra.mxu0 %v714
        %753 = vmatprep.subr.mxu0 0.0
        %754 = vmatpush2.msra.mxu0 0.0
        %755 = vmatprep.subr.mxu0 0.0
        %756 = vmatpush2.msra.mxu0 0.0
        %757 = vmatprep.subr.mxu0 0.0
        %758 = vmatpush2.msra.mxu0 0.0
        %759 = vmatprep.subr.mxu0 0.0
        %760 = vmatpush2.msra.mxu0 0.0
        %761 = vmatprep.subr.mxu0 0.0
        %762 = vmatpush2.msra.mxu0 0.0
        %763 = vmatprep.subr.mxu0 0.0
        %764 = vmatpush2.msra.mxu0 0.0
        %765 = vmatprep.subr.mxu0 0.0
        %766 = vmatpush2.msra.mxu0 0.0
        %767 = vmatprep.subr.mxu0 0.0
        %768 = vmatpush2.msra.mxu0 0.0
        %769 = vmatprep.subr.mxu0 0.0
        %770 = vmatpush2.msra.mxu0 0.0
        %771 = vmatprep.subr.mxu0 0.0
        %772 = vmatpush2.msra.mxu0 0.0
        %773 = vmatprep.subr.mxu0 0.0
        %774 = vmatpush2.msra.mxu0 0.0
        %775 = vmatprep.subr.mxu0 0.0
        %776 = vmatpush2.msra.mxu0 0.0
        %777 = vmatprep.subr.mxu0 0.0
        %778 = vmatpush2.msra.mxu0 0.0
        %779 = vmatprep.subr.mxu0 0.0
        %780 = vmatpush2.msra.mxu0 0.0
        %781 = vmatprep.subr.mxu0 0.0
        %782 = vmatpush2.msra.mxu0 0.0
        %783 = vmatprep.subr.mxu0 0.0
        %784 = vmatpush2.msra.mxu0 0.0
        %785 = vmatprep.mubr.f32.mxu0 0.0
        %786 = vmatmul.mubr.f32.gmra.mxu0 %v719
        %v787 = vpop.f32.mrf.mxu0
        %v788 = vadd.f32 %v712, %v787
        %v789 = vpop.f32.mrf.mxu0
        %790 = vdwg.mxu0
        %792 = vrot.lane.b32.xlu0 %v788, 32
        %v793 = vpop.permute.xlu0 %792
        %795 = vst.msk [vmem:[%s238 + $0x8] sm:$0xff] %vm431, %v793
        %796 = vset.pattern.permute.xlu0 6
        %797 = vperm.xlu0 %796, %v249
        %v798 = vpop.permute.xlu0 %797
        %v800 = vlaneseq
        %v801 = vshrl.u32 %v800, 7
        %v802 = vsub.s32 6, %v801
        %v803 = vrot.slane %v248, %v802
        %v804 = vmul.f32 %v798, %v803
        %s805 = scalar_lea.vmem %s211, 192 [#allocation8]
        %v806 = vld [vmem:[%s805] sm:$0xff]
        %v807 = vld [vmem:[%s805 + $0x8] sm:$0xff]
        %v808 = vld [vmem:[%s805 + $0x10] sm:$0xff]
        %v809 = vld [vmem:[%s805 + $0x18] sm:$0xff]
        %v810 = vsel %vm265, %v788, 0
        %812 = vmatprep.subr.mxu0 0.0
        %813 = vmatpush1.msra.mxu0 0.0
        %814 = vmatprep.subr.mxu0 0.0
        %815 = vmatpush1.msra.mxu0 0.0
        %816 = vmatprep.subr.mxu0 0.0
        %817 = vmatpush1.msra.mxu0 0.0
        %818 = vmatprep.subr.mxu0 0.0
        %819 = vmatpush1.msra.mxu0 0.0
        %820 = vmatprep.subr.mxu0 0.0
        %821 = vmatpush1.msra.mxu0 0.0
        %822 = vmatprep.subr.mxu0 0.0
        %823 = vmatpush1.msra.mxu0 0.0
        %824 = vmatprep.subr.mxu0 0.0
        %825 = vmatpush1.msra.mxu0 0.0
        %826 = vmatprep.subr.mxu0 0.0
        %827 = vmatpush1.msra.mxu0 0.0
        %828 = vmatprep.subr.mxu0 0.0
        %829 = vmatpush1.msra.mxu0 0.0
        %830 = vmatprep.subr.mxu0 0.0
        %831 = vmatpush1.msra.mxu0 0.0
        %832 = vmatprep.subr.mxu0 0.0
        %833 = vmatpush1.msra.mxu0 0.0
        %834 = vmatprep.subr.mxu0 0.0
        %835 = vmatpush1.msra.mxu0 0.0
        %836 = vmatprep.subr.mxu0 0.0
        %837 = vmatpush1.msra.mxu0 %v809
        %838 = vmatprep.subr.mxu0 0.0
        %839 = vmatpush1.msra.mxu0 %v808
        %840 = vmatprep.subr.mxu0 0.0
        %841 = vmatpush1.msra.mxu0 %v807
        %842 = vmatprep.subr.mxu0 0.0
        %843 = vmatpush1.msra.mxu0 %v806
        %844 = vmatprep.subr.mxu0 0.0
        %845 = vmatpush2.msra.mxu0 0.0
        %846 = vmatprep.subr.mxu0 0.0
        %847 = vmatpush2.msra.mxu0 0.0
        %848 = vmatprep.subr.mxu0 0.0
        %849 = vmatpush2.msra.mxu0 0.0
        %850 = vmatprep.subr.mxu0 0.0
        %851 = vmatpush2.msra.mxu0 0.0
        %852 = vmatprep.subr.mxu0 0.0
        %853 = vmatpush2.msra.mxu0 0.0
        %854 = vmatprep.subr.mxu0 0.0
        %855 = vmatpush2.msra.mxu0 0.0
        %856 = vmatprep.subr.mxu0 0.0
        %857 = vmatpush2.msra.mxu0 0.0
        %858 = vmatprep.subr.mxu0 0.0
        %859 = vmatpush2.msra.mxu0 0.0
        %860 = vmatprep.subr.mxu0 0.0
        %861 = vmatpush2.msra.mxu0 0.0
        %862 = vmatprep.subr.mxu0 0.0
        %863 = vmatpush2.msra.mxu0 0.0
        %864 = vmatprep.subr.mxu0 0.0
        %865 = vmatpush2.msra.mxu0 0.0
        %866 = vmatprep.subr.mxu0 0.0
        %867 = vmatpush2.msra.mxu0 0.0
        %868 = vmatprep.subr.mxu0 0.0
        %869 = vmatpush2.msra.mxu0 0.0
        %870 = vmatprep.subr.mxu0 0.0
        %871 = vmatpush2.msra.mxu0 0.0
        %872 = vmatprep.subr.mxu0 0.0
        %873 = vmatpush2.msra.mxu0 0.0
        %874 = vmatprep.subr.mxu0 0.0
        %875 = vmatpush2.msra.mxu0 0.0
        %876 = vmatprep.mubr.f32.mxu0 0.0
        %877 = vmatmul.mubr.f32.gmra.mxu0 %v810
        %v878 = vpop.f32.mrf.mxu0
        %v879 = vadd.f32 %v804, %v878
        %v880 = vpop.f32.mrf.mxu0
        %881 = vdwg.mxu0
        %883 = vrot.lane.b32.xlu0 %v879, 64
        %v884 = vpop.permute.xlu0 %883
        %886 = vst.msk [vmem:[%s238 + $0x8] sm:$0xff] %vm523, %v884
        %887 = vset.pattern.permute.xlu0 7
        %888 = vperm.xlu0 %887, %v249
        %v889 = vpop.permute.xlu0 %888
        %v891 = vlaneseq
        %v892 = vshrl.u32 %v891, 7
        %v893 = vsub.s32 7, %v892
        %v894 = vrot.slane %v248, %v893
        %v895 = vmul.f32 %v889, %v894
        %s896 = scalar_lea.vmem %s211, 224 [#allocation8]
        %v897 = vld [vmem:[%s896] sm:$0xff]
        %v898 = vld [vmem:[%s896 + $0x8] sm:$0xff]
        %v899 = vld [vmem:[%s896 + $0x10] sm:$0xff]
        %v900 = vld [vmem:[%s896 + $0x18] sm:$0xff]
        %v901 = vsel %vm265, %v879, 0
        %903 = vmatprep.subr.mxu0 0.0
        %904 = vmatpush1.msra.mxu0 0.0
        %905 = vmatprep.subr.mxu0 0.0
        %906 = vmatpush1.msra.mxu0 0.0
        %907 = vmatprep.subr.mxu0 0.0
        %908 = vmatpush1.msra.mxu0 0.0
        %909 = vmatprep.subr.mxu0 0.0
        %910 = vmatpush1.msra.mxu0 0.0
        %911 = vmatprep.subr.mxu0 0.0
        %912 = vmatpush1.msra.mxu0 0.0
        %913 = vmatprep.subr.mxu0 0.0
        %914 = vmatpush1.msra.mxu0 0.0
        %915 = vmatprep.subr.mxu0 0.0
        %916 = vmatpush1.msra.mxu0 0.0
        %917 = vmatprep.subr.mxu0 0.0
        %918 = vmatpush1.msra.mxu0 0.0
        %919 = vmatprep.subr.mxu0 0.0
        %920 = vmatpush1.msra.mxu0 0.0
        %921 = vmatprep.subr.mxu0 0.0
        %922 = vmatpush1.msra.mxu0 0.0
        %923 = vmatprep.subr.mxu0 0.0
        %924 = vmatpush1.msra.mxu0 0.0
        %925 = vmatprep.subr.mxu0 0.0
        %926 = vmatpush1.msra.mxu0 0.0
        %927 = vmatprep.subr.mxu0 0.0
        %928 = vmatpush1.msra.mxu0 %v900
        %929 = vmatprep.subr.mxu0 0.0
        %930 = vmatpush1.msra.mxu0 %v899
        %931 = vmatprep.subr.mxu0 0.0
        %932 = vmatpush1.msra.mxu0 %v898
        %933 = vmatprep.subr.mxu0 0.0
        %934 = vmatpush1.msra.mxu0 %v897
        %935 = vmatprep.subr.mxu0 0.0
        %936 = vmatpush2.msra.mxu0 0.0
        %937 = vmatprep.subr.mxu0 0.0
        %938 = vmatpush2.msra.mxu0 0.0
        %939 = vmatprep.subr.mxu0 0.0
        %940 = vmatpush2.msra.mxu0 0.0
        %941 = vmatprep.subr.mxu0 0.0
        %942 = vmatpush2.msra.mxu0 0.0
        %943 = vmatprep.subr.mxu0 0.0
        %944 = vmatpush2.msra.mxu0 0.0
        %945 = vmatprep.subr.mxu0 0.0
        %946 = vmatpush2.msra.mxu0 0.0
        %947 = vmatprep.subr.mxu0 0.0
        %948 = vmatpush2.msra.mxu0 0.0
        %949 = vmatprep.subr.mxu0 0.0
        %950 = vmatpush2.msra.mxu0 0.0
        %951 = vmatprep.subr.mxu0 0.0
        %952 = vmatpush2.msra.mxu0 0.0
        %953 = vmatprep.subr.mxu0 0.0
        %954 = vmatpush2.msra.mxu0 0.0
        %955 = vmatprep.subr.mxu0 0.0
        %956 = vmatpush2.msra.mxu0 0.0
        %957 = vmatprep.subr.mxu0 0.0
        %958 = vmatpush2.msra.mxu0 0.0
        %959 = vmatprep.subr.mxu0 0.0
        %960 = vmatpush2.msra.mxu0 0.0
        %961 = vmatprep.subr.mxu0 0.0
        %962 = vmatpush2.msra.mxu0 0.0
        %963 = vmatprep.subr.mxu0 0.0
        %964 = vmatpush2.msra.mxu0 0.0
        %965 = vmatprep.subr.mxu0 0.0
        %966 = vmatpush2.msra.mxu0 0.0
        %967 = vmatprep.mubr.f32.mxu0 0.0
        %968 = vmatmul.mubr.f32.gmra.mxu0 %v901
        %v969 = vpop.f32.mrf.mxu0
        %v970 = vadd.f32 %v895, %v969
        %v971 = vpop.f32.mrf.mxu0
        %972 = vdwg.mxu0
        %974 = vrot.lane.b32.xlu0 %v970, 96
        %v975 = vpop.permute.xlu0 %974
        %977 = vst.msk [vmem:[%s238 + $0x8] sm:$0xff] %vm615, %v975
        %978 = vst.msk [vmem:[#allocation2] sm:$0xff] %vm265, %v970
        %s979 = sand.u32 %s102, 1
        %s980 = scalar_lea.sflag [#allocation5], %s979
        %s981 = sand.u32 %s102, 1
        %s982 = smul.addr %s981, 16
        %s983 = scalar_lea.vmem [#allocation9], %s982
        // Predicated region
        $region49: #{tpu_custom_call.1} parent=31 // pred_check
          %p984 = pneg %p112
        $region50: #{tpu_custom_call.1} parent=31 // pred_check_branch
          %986 = sbr.rel (%p984) target = $region52
        $region51: #{tpu_custom_call.1} parent=31 // pred_region
          %s988 = ssub.s32 256, 256
          %989 = vsyncadd %s980, %s988
          %s990 = smul.addr %s21, 2
          %s991 = smul.addr %s990, 128
          %s992 = scalar_lea.hbm %s3, %s991
          %s994 = sshll.u32 %s983, 4
          %s995 = int_to_ptr.vmem [resolvable:$true] %s994
          %997 = dma.vmem_to_hbm [thread:$0]  %s995, 256, %s992, %s980
        $region52: #{tpu_custom_call.1} parent=31 // pred_fallthru
          _
      $region32: #{tpu_custom_call.1} parent=5 // pred_fallthru
        _
      %p998 = scmp.le.s32.totalorder 2, %s16
      // Predicated region
      $region53: #{tpu_custom_call.1} parent=5 // pred_check
        %p999 = pneg %p998
      $region54: #{tpu_custom_call.1} parent=5 // pred_check_branch
        %1001 = sbr.rel (%p999) target = $region56
      $region55: #{tpu_custom_call.1} parent=5 // pred_region
        %s1002 = ssub.s32 %s16, 2
        // Predicated region
        $region57: #{tpu_custom_call.1} parent=55 // pred_check
          %p1003 = pneg %p118
        $region58: #{tpu_custom_call.1} parent=55 // pred_check_branch
          %1005 = sbr.rel (%p1003) target = $region60
        $region59: #{tpu_custom_call.1} parent=55 // pred_region
          %s1006 = sand.u32 %s103, 1
          %s1007 = scalar_lea.sflag [#allocation5], %s1006
          %s1008 = sand.u32 %s103, 1
          %s1009 = smul.addr %s1008, 16
          %s1010 = scalar_lea.vmem [#allocation9], %s1009
          %1011 = dma.done %s1007, 256
        $region60: #{tpu_custom_call.1} parent=55 // pred_fallthru
          _
      $region56: #{tpu_custom_call.1} parent=5 // pred_fallthru
        _
    $region6: #{tpu_custom_call.1} parent=1 // loop_footer
      %s20 = sadd.s32 1, %s16
    $region7: #{tpu_custom_call.1} parent=1 // loop_footer_branch
      %15 = sbr.rel target = $region3
    $region8: #{tpu_custom_call.1} parent=1 // loop_exit
      _
    %1012 = vsyncpa [#allocation4], 1
    %s1013 = scalar_lea.sflag [#allocation4], 1
    %1014 = vsyncpa %s1013, 1
    %1015 = vsyncpa [#allocation7], 1
    %1016 = vsyncpa [#allocation5], 1
    %s1017 = scalar_lea.sflag [#allocation5], 1
    %1018 = vsyncpa %s1017, 1

</llo_original>
